<compile_context>
chip_gen: v5e
topology: v5e:2x2
jax: 0.10.0
libtpu: 0.0.40
codegen_flags: <defaults>
</compile_context>

<pallas_src>
import functools

import jax
import jax.numpy as jnp
from jax.experimental import pallas as pl
from jax.experimental.pallas import tpu as pltpu


def _round_up(x, m):
    return ((x + m - 1) // m) * m


def _ce_ls_kernel(t_ref, x_ref, loss_ref, *, epsilon, num_classes, inv_t,
                  n_valid, tile_n):
    i = pl.program_id(0)

    # (TILE_N, C) logits tile; compute in f32 regardless of input dtype.
    # Constant multiply (inv_t precomputed in Python) instead of a vector divide.
    x = x_ref[...].astype(jnp.float32) * inv_t
    labels = t_ref[...]  # (TILE_N, 1) int32

    # Numerically stable log-softmax pieces (row-wise over the lane axis).
    m = jnp.max(x, axis=1, keepdims=True)                              # (TILE_N, 1)
    shifted = x - m                                                    # (TILE_N, C)
    lse = jnp.log(jnp.sum(jnp.exp(shifted), axis=1, keepdims=True))    # (TILE_N, 1)

    # Algebraic form of -sum_j [(1-eps)*onehot_ij + eps/C] * logp_ij:
    #   (1-eps) * (lse_i - shifted_i[target_i]) + (eps/C) * (C*lse_i - sum_j shifted_ij)
    col = jax.lax.broadcasted_iota(jnp.int32, shifted.shape, 1)
    tgt_shifted = jnp.sum(jnp.where(col == labels, shifted, 0.0),
                          axis=1, keepdims=True)                       # (TILE_N, 1)
    sum_shifted = jnp.sum(shifted, axis=1, keepdims=True)              # (TILE_N, 1)

    loss = ((1.0 - epsilon) * (lse - tgt_shifted)
            + (epsilon / num_classes) * (num_classes * lse - sum_shifted))

    # Zero out padded rows of the last tile so the wrapper-side sum stays exact.
    row = jax.lax.broadcasted_iota(jnp.int32, loss.shape, 0) + i * tile_n
    loss_ref[...] = jnp.where(row < n_valid, loss, 0.0)


def cross_entropy_label_smooth(inputs, targets, *, num_classes, epsilon=0.1,
                               size_average=True, T=1.0, tile_n=512):
    """JAX/Pallas equivalent of CrossEntropyLabelSmooth.forward(inputs, targets, T)."""
    N, C = inputs.shape
    assert C == num_classes

    itemsize = jnp.dtype(inputs.dtype).itemsize
    # Minimum sublane multiple for the logits dtype (f32: 8, bf16: 16, int8/fp8: 32).
    sub = {4: 8, 2: 16, 1: 32}.get(itemsize, 8)

    # Largest batch tile whose double-buffered logits slab fits a ~8 MiB budget,
    # capped by the requested tile and the (rounded-up) batch size.
    budget = 8 * 1024 * 1024
    max_tile = max(sub, (budget // (2 * C * itemsize)) // sub * sub)
    TILE_N = max(sub, min(_round_up(N, sub), _round_up(tile_n, sub), max_tile))
    N_pad = _round_up(N, TILE_N)
    num_tiles = N_pad // TILE_N

    if N_pad != N:
        inputs = jnp.pad(inputs, ((0, N_pad - N), (0, 0)))
        targets = jnp.pad(targets, (0, N_pad - N))
    t2d = targets.astype(jnp.int32).reshape(N_pad, 1)

    kernel = functools.partial(
        _ce_ls_kernel,
        epsilon=float(epsilon),
        num_classes=int(num_classes),
        inv_t=float(1.0 / T),
        n_valid=int(N),
        tile_n=int(TILE_N),
    )

    # TODO(synk): for vocab-scale C (where even one (TILE_N, C) row slab blows the
    # VMEM budget) add a second "arbitrary" grid axis over C with an online
    # max/LSE accumulator (flash-softmax style) in VMEM scratch.

    rows = pl.pallas_call(
        kernel,
        out_shape=jax.ShapeDtypeStruct((N_pad, 1), jnp.float32),
        grid=(num_tiles,),
        in_specs=[
            pl.BlockSpec((TILE_N, 1), lambda i: (i, 0)),   # int32 labels column
            pl.BlockSpec((TILE_N, C), lambda i: (i, 0)),   # logits tile
        ],
        out_specs=pl.BlockSpec((TILE_N, 1), lambda i: (i, 0)),
        compiler_params=pltpu.CompilerParams(
            dimension_semantics=("parallel",),
            vmem_limit_bytes=32 * 1024 * 1024,
        ),
        cost_estimate=pl.CostEstimate(
            flops=8 * N * C,
            transcendentals=N * C + N,
            bytes_accessed=N * C * itemsize + N * 4 + N_pad * 4,
        ),
    )(t2d, inputs)

    rows = rows[:, 0]
    if size_average:
        # (-t * logp).mean(0).sum() == sum(per-row loss) / N
        return jnp.sum(rows) / N
    return rows[:N]


def _reference(inputs, targets, *, num_classes, epsilon=0.1, size_average=True, T=1.0):
    """Pure-JAX reference mirroring the PyTorch module."""
    log_probs = jax.nn.log_softmax(inputs.astype(jnp.float32) / T, axis=1)
    onehot = jax.nn.one_hot(targets, num_classes, dtype=jnp.float32)
    smooth = (1.0 - epsilon) * onehot + epsilon / num_classes
    neg = -smooth * log_probs
    if size_average:
        return neg.mean(0).sum()
    return neg.sum(1)


if __name__ == "__main__":
    key = jax.random.PRNGKey(0)
    k_x, k_t, k_x2, k_t2 = jax.random.split(key, 4)

    # Small shapes consistent with the module: (batch, num_classes) logits + labels.
    N, C = 8, 32
    inputs = jax.random.normal(k_x, (N, C), dtype=jnp.float32)
    targets = jax.random.randint(k_t, (N,), 0, C, dtype=jnp.int32)

    # size_average=True (default): scalar loss.
    loss = cross_entropy_label_smooth(
        inputs, targets, num_classes=C, epsilon=0.1, size_average=True, T=1.0)
    loss = jax.block_until_ready(loss)
    ref = _reference(inputs, targets, num_classes=C, epsilon=0.1,
                     size_average=True, T=1.0)
    assert jnp.allclose(loss, ref, atol=1e-5, rtol=1e-5), (loss, ref)

    # size_average=False: per-row loss, with temperature T != 1.
    loss_rows = cross_entropy_label_smooth(
        inputs, targets, num_classes=C, epsilon=0.1, size_average=False, T=2.0)
    loss_rows = jax.block_until_ready(loss_rows)
    ref_rows = _reference(inputs, targets, num_classes=C, epsilon=0.1,
                          size_average=False, T=2.0)
    assert jnp.allclose(loss_rows, ref_rows, atol=1e-5, rtol=1e-5), (loss_rows, ref_rows)

    # Multi-tile + ragged batch (exercises the batch grid, padding, and row mask).
    N2, C2 = 50, 130
    inputs2 = jax.random.normal(k_x2, (N2, C2), dtype=jnp.float32)
    targets2 = jax.random.randint(k_t2, (N2,), 0, C2, dtype=jnp.int32)
    loss2 = cross_entropy_label_smooth(
        inputs2, targets2, num_classes=C2, epsilon=0.1, size_average=True, T=1.0,
        tile_n=16)
    loss2 = jax.block_until_ready(loss2)
    ref2 = _reference(inputs2, targets2, num_classes=C2, epsilon=0.1,
                      size_average=True, T=1.0)
    assert jnp.allclose(loss2, ref2, atol=1e-5, rtol=1e-5), (loss2, ref2)

    print("KERNEL_OK")
</pallas_src>

<mosaic_0001>
module attributes {stable_mosaic.version = 11 : i64} {
  func.func @_ce_ls_kernel(%arg0: i32, %arg1: memref<8x1xi32, #tpu.memory_space<vmem>>, %arg2: memref<8x32xf32, #tpu.memory_space<vmem>>, %arg3: memref<8x1xf32, #tpu.memory_space<vmem>>) attributes {dimension_semantics = [#tpu.dimension_semantics<parallel>], iteration_bounds = array<i64: 1>, scalar_prefetch = 0 : i64, scratch_operands = 0 : i64, tpu.core_type = #tpu.core_type<tc>, window_params = [{transform_indices = @transform_0, window_bounds = array<i64: 8, 1>}, {transform_indices = @transform_1, window_bounds = array<i64: 8, 32>}, {transform_indices = @transform_2, window_bounds = array<i64: 8, 1>}]} {
    %c0 = arith.constant 0 : index
    %c0_0 = arith.constant 0 : index
    %0 = vector.load %arg2[%c0, %c0_0] : memref<8x32xf32, #tpu.memory_space<vmem>>, vector<8x32xf32>
    %cst = arith.constant 1.000000e+00 : f32
    %1 = vector.broadcast %cst : f32 to vector<8x32xf32>
    %2 = arith.mulf %0, %1 : vector<8x32xf32>
    %c0_1 = arith.constant 0 : index
    %c0_2 = arith.constant 0 : index
    %3 = vector.load %arg1[%c0_1, %c0_2] : memref<8x1xi32, #tpu.memory_space<vmem>>, vector<8x1xi32>
    %cst_3 = arith.constant dense<0xFF800000> : vector<8xf32>
    %4 = vector.multi_reduction <maximumf>, %2, %cst_3 [1] : vector<8x32xf32> to vector<8xf32>
    %5 = vector.shape_cast %4 : vector<8xf32> to vector<8x1xf32>
    %6 = vector.broadcast %5 : vector<8x1xf32> to vector<8x32xf32>
    %7 = arith.subf %2, %6 : vector<8x32xf32>
    %8 = math.exp %7 : vector<8x32xf32>
    %cst_4 = arith.constant dense<0.000000e+00> : vector<8xf32>
    %9 = vector.multi_reduction <add>, %8, %cst_4 [1] : vector<8x32xf32> to vector<8xf32>
    %10 = vector.shape_cast %9 : vector<8xf32> to vector<8x1xf32>
    %11 = math.log %10 : vector<8x1xf32>
    %12 = tpu.iota {dimensions = array<i32: 1>} : vector<8x32xi32>
    %13 = vector.broadcast %3 : vector<8x1xi32> to vector<8x32xi32>
    %14 = arith.cmpi eq, %12, %13 : vector<8x32xi32>
    %cst_5 = arith.constant 0.000000e+00 : f32
    %15 = vector.broadcast %cst_5 : f32 to vector<8x32xf32>
    %16 = arith.select %14, %7, %15 : vector<8x32xi1>, vector<8x32xf32>
    %cst_6 = arith.constant dense<0.000000e+00> : vector<8xf32>
    %17 = vector.multi_reduction <add>, %16, %cst_6 [1] : vector<8x32xf32> to vector<8xf32>
    %18 = vector.shape_cast %17 : vector<8xf32> to vector<8x1xf32>
    %cst_7 = arith.constant dense<0.000000e+00> : vector<8xf32>
    %19 = vector.multi_reduction <add>, %7, %cst_7 [1] : vector<8x32xf32> to vector<8xf32>
    %20 = vector.shape_cast %19 : vector<8xf32> to vector<8x1xf32>
    %21 = arith.subf %11, %18 : vector<8x1xf32>
    %cst_8 = arith.constant 0.899999976 : f32
    %22 = vector.broadcast %cst_8 : f32 to vector<8x1xf32>
    %23 = arith.mulf %22, %21 : vector<8x1xf32>
    %cst_9 = arith.constant 3.200000e+01 : f32
    %24 = vector.broadcast %cst_9 : f32 to vector<8x1xf32>
    %25 = arith.mulf %24, %11 : vector<8x1xf32>
    %26 = arith.subf %25, %20 : vector<8x1xf32>
    %cst_10 = arith.constant 3.125000e-03 : f32
    %27 = vector.broadcast %cst_10 : f32 to vector<8x1xf32>
    %28 = arith.mulf %27, %26 : vector<8x1xf32>
    %29 = arith.addf %23, %28 : vector<8x1xf32>
    %30 = tpu.iota {dimensions = array<i32: 0>} : vector<8x1xi32>
    %c8_i32 = arith.constant 8 : i32
    %31 = arith.muli %arg0, %c8_i32 : i32
    %32 = vector.broadcast %31 : i32 to vector<8x1xi32>
    %33 = arith.addi %30, %32 : vector<8x1xi32>
    %c8_i32_11 = arith.constant 8 : i32
    %34 = vector.broadcast %c8_i32_11 : i32 to vector<8x1xi32>
    %35 = arith.cmpi slt, %33, %34 : vector<8x1xi32>
    %cst_12 = arith.constant 0.000000e+00 : f32
    %36 = vector.broadcast %cst_12 : f32 to vector<8x1xf32>
    %37 = arith.select %35, %29, %36 : vector<8x1xi1>, vector<8x1xf32>
    %c0_13 = arith.constant 0 : index
    %c0_14 = arith.constant 0 : index
    %38 = vector.load %arg3[%c0_13, %c0_14] : memref<8x1xf32, #tpu.memory_space<vmem>>, vector<8x1xf32>
    tpu.vector_store %arg3[%c0_13, %c0_14], %37 {strides = array<i32>} : memref<8x1xf32, #tpu.memory_space<vmem>>, vector<8x1xf32>,
    return
  }
  func.func @transform_0(%arg0: i32) -> (i32, i32) {
    %c0_i32 = arith.constant 0 : i32
    %c0_i32_0 = arith.constant 0 : i32
    return %arg0, %c0_i32 : i32, i32
  }
  func.func @transform_1(%arg0: i32) -> (i32, i32) {
    %c0_i32 = arith.constant 0 : i32
    %c0_i32_0 = arith.constant 0 : i32
    return %arg0, %c0_i32 : i32, i32
  }
  func.func @transform_2(%arg0: i32) -> (i32, i32) {
    %c0_i32 = arith.constant 0 : i32
    %c0_i32_0 = arith.constant 0 : i32
    return %arg0, %c0_i32 : i32, i32
  }
}

</mosaic_0001>

<llo_original>
// kernel: tpu_custom_call.1
$region0: #{tpu_custom_call.1}
  #allocation0 [shape = 'u32[]', space=smem, size = 0x4, offset = 0x4, fixed_abs, tag = 'smem constant byte address 0x4 - core index']
  #allocation1 [shape = 'u32[72,128]{1,0:T(1,128)}', space=vmem, size = 0x9000, scoped, tag = 'internal scratch']
  %s0 = inlined_call_operand.vmem [shape: s32[8,1], index: 0, kind: input, shape index: {}]
  %s1 = inlined_call_operand.vmem [shape: f32[8,32], index: 1, kind: input, shape index: {}]
  %s2 = inlined_call_operand.vmem [shape: f32[8,1], index: 2, kind: output, shape index: {}]
  %s3 = sld [smem:[#allocation0]]
  $region18: #{tpu_custom_call.1} parent=0
    _
  %s5 = ssub.s32 1, %s3
  %s6 = scalar_select 0, %s5, %s3
  // Predicated region
  $region2: #{tpu_custom_call.1} parent=0 // pred_check
    _
  $region3: #{tpu_custom_call.1} parent=0 // pred_check_branch
    %8 = sbr.rel (0) target = $region5
  $region4: #{tpu_custom_call.1} parent=0 // pred_region
    _
  $region5: #{tpu_custom_call.1} parent=0 // pred_fallthru
    _
  // Predicated region
  $region6: #{tpu_custom_call.1} parent=0 // pred_check
    _
  $region7: #{tpu_custom_call.1} parent=0 // pred_check_branch
    %10 = sbr.rel (0) target = $region9
  $region8: #{tpu_custom_call.1} parent=0 // pred_region
    _
  $region9: #{tpu_custom_call.1} parent=0 // pred_fallthru
    _
  %v11 = vld [vmem:[%s1] sm:$0xff]
  %v12 = vld [vmem:[%s0] sm:$0xff]
  %vm13 = vcmask 261120
  %v14 = vsel %vm13, %v11, -inf
  %15 = vmax.xlane.f32.xlu0 %v14
  %v16 = vpop.xlane.xlu0 %15
  %v17 = vsub.f32 %v11, %v16
  %v18 = vmul.f32 %v17, 1.442695
  %v19 = vpow.pop %v18
  %v20 = vsel %vm13, %v19, 0.0
  %21 = vadd.xlane.f32.xlu0 %v20
  %v22 = vpop.xlane.xlu0 %21
  %v23 = vlog2.pop %v22
  %v24 = vmul.f32 %v23, 0.6931472
  %v25 = vlaneseq
  %v26 = vand.u32 %v25, 127
  %27 = vset.pattern.permute.xlu0 0
  %28 = vperm.xlu0 %27, %v12
  %v29 = vpop.permute.xlu0 %28
  %vm30 = vcmp.eq.s32.totalorder %v26, %v29
  %v31 = vsel %vm30, %v17, 0.0
  %v32 = vsel %vm13, %v31, 0.0
  %33 = vadd.xlane.f32.xlu0 %v32
  %v34 = vpop.xlane.xlu0 %33
  %v35 = vsel %vm13, %v17, 0.0
  %36 = vadd.xlane.f32.xlu0 %v35
  %v37 = vpop.xlane.xlu0 %36
  %v38 = vsub.f32 %v24, %v34
  %v39 = vmul.f32 %v38, 0.9
  %v40 = vmul.f32 %v24, 32.0
  %v41 = vsub.f32 %v40, %v37
  %v42 = vmul.f32 %v41, 0.003125
  %v43 = vadd.f32 %v39, %v42
  %v44 = vlaneseq
  %v45 = vshrl.u32 %v44, 7
  %s46 = smul.u32 0, 8
  %v47 = vstv %s46
  %v48 = vadd.s32 %v45, %v47
  %vm49 = vcmp.lt.s32.totalorder %v48, 8
  %v50 = vsel %vm49, %v43, 0.0
  %vm51 = vcmask 7168
  %52 = vst.msk [vmem:[%s2] sm:$0xff] %vm51, %v50
  // Predicated region
  $region10: #{tpu_custom_call.1} parent=0 // pred_check
    _
  $region11: #{tpu_custom_call.1} parent=0 // pred_check_branch
    %54 = sbr.rel (0) target = $region13
  $region12: #{tpu_custom_call.1} parent=0 // pred_region
    _
  $region13: #{tpu_custom_call.1} parent=0 // pred_fallthru
    _
  // Predicated region
  $region14: #{tpu_custom_call.1} parent=0 // pred_check
    _
  $region15: #{tpu_custom_call.1} parent=0 // pred_check_branch
    %56 = sbr.rel (0) target = $region17
  $region16: #{tpu_custom_call.1} parent=0 // pred_region
    _
  $region17: #{tpu_custom_call.1} parent=0 // pred_fallthru
    _

</llo_original>
